<compile_context>
chip_gen: v5e
topology: v5e:2x2
jax: 0.10.0
libtpu: 0.0.40
codegen_flags: <defaults>
</compile_context>

<pallas_src>
import numpy as np
import jax
import jax.numpy as jnp
from jax.experimental import pallas as pl
from jax.experimental.pallas import tpu as pltpu


# ----------------------------------------------------------------------------
# Fused Pallas kernel
# ----------------------------------------------------------------------------
def _make_sdc_kernel(H, W, C, mid, k, dil):
    pad = dil * (k - 1) // 2
    Hp = H + 2 * pad          # scratch is only padded along H; W padding is
    Wm = W * mid              # folded into the per-kh conv matrices.
    WC = W * C

    def kernel(x_ref, w1_ref, s1_ref, t1_ref, w2_ref, s2_ref, t2_ref,
               w3_ref, s3_ref, t3_ref, alphas_ref, o_ref, ypad_ref):
        a1 = alphas_ref[0]
        a2 = alphas_ref[1]
        af = alphas_ref[2]

        x_rows = x_ref[...]                                   # (H, W*C) f32

        # -- stage 1: grouped 1x1 conv (+ channel shuffle) + BN + PReLU ------
        h1 = jnp.dot(x_rows.astype(jnp.bfloat16), w1_ref[...],
                     preferred_element_type=jnp.float32)       # (H, W*mid)
        h1 = h1 * s1_ref[...] + t1_ref[...]
        h1 = jnp.where(h1 >= 0.0, h1, a1 * h1)

        # -- stage 2: dilated k x k conv (groups=1) + BN + PReLU -------------
        # zero-padded (along H) copy of h1 lives in VMEM scratch; each of the
        # k kernel rows is one lane-aligned sublane slice + one MXU matmul.
        ypad_ref[...] = jnp.zeros((Hp, Wm), jnp.float32)
        ypad_ref[pad:pad + H, :] = h1
        acc = jnp.zeros((H, Wm), jnp.float32)
        for kh in range(k):
            rows = ypad_ref[kh * dil:kh * dil + H, :]          # (H, W*mid)
            acc = acc + jnp.dot(rows.astype(jnp.bfloat16), w2_ref[kh],
                                preferred_element_type=jnp.float32)
        acc = acc * s2_ref[...] + t2_ref[...]
        h2 = jnp.where(acc >= 0.0, acc, a2 * acc)

        # -- stage 3: grouped 1x1 expansion + BN -----------------------------
        h3 = jnp.dot(h2.astype(jnp.bfloat16), w3_ref[...],
                     preferred_element_type=jnp.float32)       # (H, W*C)
        h3 = h3 * s3_ref[...] + t3_ref[...]
        # TODO(synk): Dropout2d(dr_rate) is eval-mode identity here (inference).

        # -- residual + final PReLU; single lane-dense store -----------------
        y = x_rows + h3
        y = jnp.where(y >= 0.0, y, af * y)
        o_ref[...] = y.astype(o_ref.dtype)

    return kernel


def sdc_block_forward(x_nchw, fused, *, mid, kernel_size, dilation):
    """SDCBlock forward.  x: (B, C, H, W) NCHW float32."""
    x_nchw = jnp.asarray(x_nchw, jnp.float32)
    B, C, H, W = x_nchw.shape
    k, dil = kernel_size, dilation
    pad = dil * (k - 1) // 2
    Hp = H + 2 * pad
    Wm, WC = W * mid, W * C
    assert H % 8 == 0, "H must be a multiple of 8 (TPU sublane tiling)"

    # NCHW -> NHWC; the NHWC buffer viewed as a lane-dense (B*H, W*C) slab
    # (pure metadata reshape, same bytes).
    x2d = jnp.transpose(x_nchw, (0, 2, 3, 1)).reshape(B * H, WC)

    kern = _make_sdc_kernel(H, W, C, mid, k, dil)

    def resident(shape):  # weights / folded BN: stay in VMEM across the grid
        return pl.BlockSpec(shape, lambda b: (0,) * len(shape))

    out2d = pl.pallas_call(
        kern,
        out_shape=jax.ShapeDtypeStruct((B * H, WC), jnp.float32),
        grid=(B,),
        in_specs=[
            pl.BlockSpec((H, WC), lambda b: (b, 0)),          # one image / step
            resident((WC, Wm)),                               # stage-1 weights
            resident((1, Wm)), resident((1, Wm)),             # stage-1 scale/shift
            resident((k, Wm, Wm)),                            # stage-2 row matrices
            resident((1, Wm)), resident((1, Wm)),             # stage-2 scale/shift
            resident((Wm, WC)),                               # stage-3 weights
            resident((1, WC)), resident((1, WC)),             # stage-3 scale/shift
            pl.BlockSpec(memory_space=pltpu.MemorySpace.SMEM),  # PReLU alphas
        ],
        out_specs=pl.BlockSpec((H, WC), lambda b: (b, 0)),
        scratch_shapes=[pltpu.VMEM((Hp, Wm), jnp.float32)],
        compiler_params=pltpu.CompilerParams(
            dimension_semantics=("parallel",),                # megacore over batch
            vmem_limit_bytes=32 * 1024 * 1024,                # v7x-safe budget
        ),
    )(x2d, fused['w1'], fused['s1'], fused['t1'],
      fused['w2'], fused['s2'], fused['t2'],
      fused['w3'], fused['s3'], fused['t3'], fused['alphas'])

    return jnp.transpose(out2d.reshape(B, H, W, C), (0, 3, 1, 2))


# ----------------------------------------------------------------------------
# Host-side parameter folding (PyTorch layout -> fused kernel operands)
# ----------------------------------------------------------------------------
def fold_sdc_params(raw, *, W, groups, dilation, eps=1e-5):
    w1 = np.asarray(raw['w1'], np.float32)            # (mid, C//g, 1, 1)
    w2 = np.asarray(raw['w2'], np.float32)            # (mid, mid, k, k)
    w3 = np.asarray(raw['w3'], np.float32)            # (C,   mid//g, 1, 1)
    mid = w1.shape[0]
    Cout = w3.shape[0]
    k = w2.shape[2]
    pad = dilation * (k - 1) // 2

    def dense_grouped(w4d, g):                         # grouped 1x1 -> dense (Cin, Cout)
        cout, ipg = w4d.shape[0], w4d.shape[1]
        opg = cout // g
        d = np.zeros((ipg * g, cout), np.float32)
        w2d = w4d[:, :, 0, 0]
        for gi in range(g):
            d[gi * ipg:(gi + 1) * ipg, gi * opg:(gi + 1) * opg] = \
                w2d[gi * opg:(gi + 1) * opg, :].T
        return d

    def fold_bn(bn, bias):                             # conv-bias + BN -> scale, shift
        gamma, beta, mean, var = (np.asarray(t, np.float32) for t in bn)
        scale = gamma / np.sqrt(var + eps)
        shift = beta - mean * scale + np.asarray(bias, np.float32) * scale
        return scale, shift

    # stage 1: grouped 1x1 + BN, channel shuffle folded as a column permutation
    w1d = dense_grouped(w1, groups)
    s1, t1 = fold_bn(raw['bn1'], raw['b1'])
    if groups > 1:
        cpg = mid // groups
        src = np.array([(q % groups) * cpg + q // groups for q in range(mid)])
        w1d, s1, t1 = w1d[:, src], s1[src], t1[src]

    # stage 2: one (W*mid, W*mid) matrix per kernel row; the W-direction
    # zero-padding is folded in by dropping out-of-range source columns.
    s2, t2 = fold_bn(raw['bn2'], raw['b2'])
    a_rows = np.zeros((k, W * mid, W * mid), np.float32)
    for kh in range(k):
        for kw in range(k):
            wt = w2[:, :, kh, kw].T                    # (in, out)
            for w in range(W):
                ws = w + kw * dilation - pad
                if 0 <= ws < W:
                    a_rows[kh, ws * mid:(ws + 1) * mid, w * mid:(w + 1) * mid] += wt

    # stage 3: grouped 1x1 expansion + BN
    w3d = dense_grouped(w3, groups)
    s3, t3 = fold_bn(raw['bn3'], raw['b3'])

    eye_w = np.eye(W, dtype=np.float32)
    tile = lambda v, n: jnp.asarray(np.tile(v, W).reshape(1, W * n), jnp.float32)
    return dict(
        w1=jnp.asarray(np.kron(eye_w, w1d), jnp.bfloat16),     # (W*C,   W*mid)
        s1=tile(s1, mid), t1=tile(t1, mid),
        w2=jnp.asarray(a_rows, jnp.bfloat16),                  # (k, W*mid, W*mid)
        s2=tile(s2, mid), t2=tile(t2, mid),
        w3=jnp.asarray(np.kron(eye_w, w3d), jnp.bfloat16),     # (W*mid, W*C)
        s3=tile(s3, Cout), t3=tile(t3, Cout),
        alphas=jnp.asarray(np.array([raw['a1'], raw['a2'], raw['af']], np.float32)),
    )


# ----------------------------------------------------------------------------
# Deterministic synthetic parameters (PyTorch layout) + pure-JAX reference
# ----------------------------------------------------------------------------
def init_sdc_params(key, in_channels, out_channels, reduction, kernel_size, groups):
    assert in_channels == out_channels          # required by the residual add
    mid = out_channels // reduction
    assert mid % groups == 0 and in_channels % groups == 0
    ks = iter(jax.random.split(key, 32))
    nk = lambda: next(ks)

    def bn(c):
        return (1.0 + 0.1 * jax.random.normal(nk(), (c,), jnp.float32),
                0.05 * jax.random.normal(nk(), (c,), jnp.float32),
                0.1 * jax.random.normal(nk(), (c,), jnp.float32),
                1.0 + 0.1 * jnp.abs(jax.random.normal(nk(), (c,), jnp.float32)))

    return dict(
        w1=0.2 * jax.random.normal(nk(), (mid, in_channels // groups, 1, 1), jnp.float32),
        b1=0.05 * jax.random.normal(nk(), (mid,), jnp.float32), bn1=bn(mid), a1=0.25,
        w2=0.2 * jax.random.normal(nk(), (mid, mid, kernel_size, kernel_size), jnp.float32),
        b2=0.05 * jax.random.normal(nk(), (mid,), jnp.float32), bn2=bn(mid), a2=0.20,
        w3=0.2 * jax.random.normal(nk(), (out_channels, mid // groups, 1, 1), jnp.float32),
        b3=0.05 * jax.random.normal(nk(), (out_channels,), jnp.float32),
        bn3=bn(out_channels), af=0.15,
    )


def _conv2d(x, w, b, padding, dilation, groups):
    y = jax.lax.conv_general_dilated(
        x, w, window_strides=(1, 1),
        padding=((padding, padding), (padding, padding)),
        rhs_dilation=(dilation, dilation),
        dimension_numbers=('NCHW', 'OIHW', 'NCHW'),
        feature_group_count=groups, precision=jax.lax.Precision.HIGHEST)
    return y + b.reshape(1, -1, 1, 1)


def _bn(x, bn, eps=1e-5):
    g, b, m, v = (t.reshape(1, -1, 1, 1) for t in bn)
    return (x - m) / jnp.sqrt(v + eps) * g + b


def _prelu(x, a):
    return jnp.where(x >= 0, x, a * x)


def sdc_reference(x, p, kernel_size, dilation, groups):
    pad = dilation * (kernel_size - 1) // 2
    h = _prelu(_bn(_conv2d(x, p['w1'], p['b1'], 0, 1, groups), p['bn1']), p['a1'])
    if groups > 1:
        B, C, H, W = h.shape
        h = h.reshape(B, groups, C // groups, H, W).transpose(0, 2, 1, 3, 4).reshape(B, C, H, W)
    h = _prelu(_bn(_conv2d(h, p['w2'], p['b2'], pad, dilation, 1), p['bn2']), p['a2'])
    h = _bn(_conv2d(h, p['w3'], p['b3'], 0, 1, groups), p['bn3'])
    return _prelu(x + h, p['af'])       # Dropout2d: eval-mode identity


# ----------------------------------------------------------------------------
if __name__ == "__main__":
    key = jax.random.PRNGKey(0)
    B, C, H, W = 2, 16, 16, 16
    reduction, kernel_size, dilation, groups = 2, 3, 2, 2
    mid = C // reduction

    kx, kp = jax.random.split(key)
    x = jax.random.normal(kx, (B, C, H, W), jnp.float32)
    raw = init_sdc_params(kp, C, C, reduction, kernel_size, groups)
    fused = fold_sdc_params(raw, W=W, groups=groups, dilation=dilation)

    out = sdc_block_forward(x, fused, mid=mid, kernel_size=kernel_size,
                            dilation=dilation)
    out = jax.block_until_ready(out)
    assert out.shape == (B, C, H, W), out.shape
    assert bool(jnp.all(jnp.isfinite(out)))

    # sanity check against a pure-JAX/XLA reference (bf16 matmul tolerance)
    ref = sdc_reference(x, raw, kernel_size, dilation, groups)
    rel_err = float(jnp.mean(jnp.abs(out - ref)) / (jnp.mean(jnp.abs(ref)) + 1e-6))
    assert rel_err < 0.05, f"kernel/reference mismatch: rel_err={rel_err:.4f}"

    print("KERNEL_OK")
</pallas_src>

<mosaic_0001>
module attributes {stable_mosaic.version = 11 : i64} {
  func.func @kernel(%arg0: i32, %arg1: memref<16x256xf32, #tpu.memory_space<vmem>>, %arg2: memref<256x128xbf16, #tpu.memory_space<vmem>>, %arg3: memref<1x128xf32, #tpu.memory_space<vmem>>, %arg4: memref<1x128xf32, #tpu.memory_space<vmem>>, %arg5: memref<3x128x128xbf16, #tpu.memory_space<vmem>>, %arg6: memref<1x128xf32, #tpu.memory_space<vmem>>, %arg7: memref<1x128xf32, #tpu.memory_space<vmem>>, %arg8: memref<128x256xbf16, #tpu.memory_space<vmem>>, %arg9: memref<1x256xf32, #tpu.memory_space<vmem>>, %arg10: memref<1x256xf32, #tpu.memory_space<vmem>>, %arg11: memref<3xf32, #tpu.memory_space<smem>>, %arg12: memref<16x256xf32, #tpu.memory_space<vmem>>, %arg13: memref<20x128xf32, #tpu.memory_space<vmem>>) attributes {dimension_semantics = [#tpu.dimension_semantics<parallel>], iteration_bounds = array<i64: 2>, scalar_prefetch = 0 : i64, scratch_operands = 1 : i64, tpu.core_type = #tpu.core_type<tc>, window_params = [{transform_indices = @transform_0, window_bounds = array<i64: 16, 256>}, {pipeline_mode = #tpu.pipeline_mode<synchronous>, transform_indices = @transform_1, window_bounds = array<i64: 256, 128>}, {pipeline_mode = #tpu.pipeline_mode<synchronous>, transform_indices = @transform_2, window_bounds = array<i64: 1, 128>}, {pipeline_mode = #tpu.pipeline_mode<synchronous>, transform_indices = @transform_3, window_bounds = array<i64: 1, 128>}, {pipeline_mode = #tpu.pipeline_mode<synchronous>, transform_indices = @transform_4, window_bounds = array<i64: 3, 128, 128>}, {pipeline_mode = #tpu.pipeline_mode<synchronous>, transform_indices = @transform_5, window_bounds = array<i64: 1, 128>}, {pipeline_mode = #tpu.pipeline_mode<synchronous>, transform_indices = @transform_6, window_bounds = array<i64: 1, 128>}, {pipeline_mode = #tpu.pipeline_mode<synchronous>, transform_indices = @transform_7, window_bounds = array<i64: 128, 256>}, {pipeline_mode = #tpu.pipeline_mode<synchronous>, transform_indices = @transform_8, window_bounds = array<i64: 1, 256>}, {pipeline_mode = #tpu.pipeline_mode<synchronous>, transform_indices = @transform_9, window_bounds = array<i64: 1, 256>}, {transform_indices = @transform_10, window_bounds = array<i64: 3>}, {transform_indices = @transform_11, window_bounds = array<i64: 16, 256>}]} {
    %c0 = arith.constant 0 : index
    %0 = memref.load %arg11[%c0] : memref<3xf32, #tpu.memory_space<smem>>
    %c1 = arith.constant 1 : index
    %1 = memref.load %arg11[%c1] : memref<3xf32, #tpu.memory_space<smem>>
    %c2 = arith.constant 2 : index
    %2 = memref.load %arg11[%c2] : memref<3xf32, #tpu.memory_space<smem>>
    %c0_0 = arith.constant 0 : index
    %c0_1 = arith.constant 0 : index
    %3 = vector.load %arg1[%c0_0, %c0_1] : memref<16x256xf32, #tpu.memory_space<vmem>>, vector<16x256xf32>
    %4 = arith.truncf %3 : vector<16x256xf32> to vector<16x256xbf16>
    %c0_2 = arith.constant 0 : index
    %c0_3 = arith.constant 0 : index
    %5 = vector.load %arg2[%c0_2, %c0_3] : memref<256x128xbf16, #tpu.memory_space<vmem>>, vector<256x128xbf16>
    %cst = arith.constant dense<0.000000e+00> : vector<16x128xf32>
    %6 = tpu.matmul %4, %5, %cst {dimension_numbers = #tpu.dot_dimension_numbers<[1], [0], [0], [1], [0, 0, 1, 1], [], []>} : vector<16x256xbf16>, vector<256x128xbf16>, vector<16x128xf32> -> vector<16x128xf32>
    %c0_4 = arith.constant 0 : index
    %c0_5 = arith.constant 0 : index
    %7 = vector.load %arg3[%c0_4, %c0_5] : memref<1x128xf32, #tpu.memory_space<vmem>>, vector<1x128xf32>
    %8 = vector.broadcast %7 : vector<1x128xf32> to vector<16x128xf32>
    %9 = arith.mulf %6, %8 : vector<16x128xf32>
    %c0_6 = arith.constant 0 : index
    %c0_7 = arith.constant 0 : index
    %10 = vector.load %arg4[%c0_6, %c0_7] : memref<1x128xf32, #tpu.memory_space<vmem>>, vector<1x128xf32>
    %11 = vector.broadcast %10 : vector<1x128xf32> to vector<16x128xf32>
    %12 = arith.addf %9, %11 : vector<16x128xf32>
    %cst_8 = arith.constant 0.000000e+00 : f32
    %13 = vector.broadcast %cst_8 : f32 to vector<16x128xf32>
    %14 = arith.cmpf oge, %12, %13 : vector<16x128xf32>
    %15 = vector.broadcast %0 : f32 to vector<16x128xf32>
    %16 = arith.mulf %15, %12 : vector<16x128xf32>
    %17 = arith.select %14, %12, %16 : vector<16x128xi1>, vector<16x128xf32>
    %cst_9 = arith.constant 0.000000e+00 : f32
    %18 = vector.broadcast %cst_9 : f32 to vector<20x128xf32>
    %c0_10 = arith.constant 0 : index
    %c0_11 = arith.constant 0 : index
    %19 = vector.load %arg13[%c0_10, %c0_11] : memref<20x128xf32, #tpu.memory_space<vmem>>, vector<20x128xf32>
    tpu.vector_store %arg13[%c0_10, %c0_11], %18 {strides = array<i32>} : memref<20x128xf32, #tpu.memory_space<vmem>>, vector<20x128xf32>,
    %c2_12 = arith.constant 2 : index
    %c0_13 = arith.constant 0 : index
    %20 = vector.load %arg13[%c2_12, %c0_13] : memref<20x128xf32, #tpu.memory_space<vmem>>, vector<16x128xf32>
    tpu.vector_store %arg13[%c2_12, %c0_13], %17 {strides = array<i32>} : memref<20x128xf32, #tpu.memory_space<vmem>>, vector<16x128xf32>,
    %cst_14 = arith.constant 0.000000e+00 : f32
    %21 = vector.broadcast %cst_14 : f32 to vector<16x128xf32>
    %c0_15 = arith.constant 0 : index
    %c0_16 = arith.constant 0 : index
    %22 = vector.load %arg13[%c0_15, %c0_16] : memref<20x128xf32, #tpu.memory_space<vmem>>, vector<16x128xf32>
    %23 = arith.truncf %22 : vector<16x128xf32> to vector<16x128xbf16>
    %c0_17 = arith.constant 0 : index
    %c0_18 = arith.constant 0 : index
    %c0_19 = arith.constant 0 : index
    %24 = vector.load %arg5[%c0_17, %c0_18, %c0_19] : memref<3x128x128xbf16, #tpu.memory_space<vmem>>, vector<1x128x128xbf16>
    %25 = vector.shape_cast %24 : vector<1x128x128xbf16> to vector<128x128xbf16>
    %cst_20 = arith.constant dense<0.000000e+00> : vector<16x128xf32>
    %26 = tpu.matmul %23, %25, %cst_20 {dimension_numbers = #tpu.dot_dimension_numbers<[1], [0], [0], [1], [0, 0, 1, 1], [], []>} : vector<16x128xbf16>, vector<128x128xbf16>, vector<16x128xf32> -> vector<16x128xf32>
    %27 = arith.addf %21, %26 : vector<16x128xf32>
    %c2_21 = arith.constant 2 : index
    %c0_22 = arith.constant 0 : index
    %28 = vector.load %arg13[%c2_21, %c0_22] : memref<20x128xf32, #tpu.memory_space<vmem>>, vector<16x128xf32>
    %29 = arith.truncf %28 : vector<16x128xf32> to vector<16x128xbf16>
    %c1_23 = arith.constant 1 : index
    %c0_24 = arith.constant 0 : index
    %c0_25 = arith.constant 0 : index
    %30 = vector.load %arg5[%c1_23, %c0_24, %c0_25] : memref<3x128x128xbf16, #tpu.memory_space<vmem>>, vector<1x128x128xbf16>
    %31 = vector.shape_cast %30 : vector<1x128x128xbf16> to vector<128x128xbf16>
    %cst_26 = arith.constant dense<0.000000e+00> : vector<16x128xf32>
    %32 = tpu.matmul %29, %31, %cst_26 {dimension_numbers = #tpu.dot_dimension_numbers<[1], [0], [0], [1], [0, 0, 1, 1], [], []>} : vector<16x128xbf16>, vector<128x128xbf16>, vector<16x128xf32> -> vector<16x128xf32>
    %33 = arith.addf %27, %32 : vector<16x128xf32>
    %c4 = arith.constant 4 : index
    %c0_27 = arith.constant 0 : index
    %34 = vector.load %arg13[%c4, %c0_27] : memref<20x128xf32, #tpu.memory_space<vmem>>, vector<16x128xf32>
    %35 = arith.truncf %34 : vector<16x128xf32> to vector<16x128xbf16>
    %c2_28 = arith.constant 2 : index
    %c0_29 = arith.constant 0 : index
    %c0_30 = arith.constant 0 : index
    %36 = vector.load %arg5[%c2_28, %c0_29, %c0_30] : memref<3x128x128xbf16, #tpu.memory_space<vmem>>, vector<1x128x128xbf16>
    %37 = vector.shape_cast %36 : vector<1x128x128xbf16> to vector<128x128xbf16>
    %cst_31 = arith.constant dense<0.000000e+00> : vector<16x128xf32>
    %38 = tpu.matmul %35, %37, %cst_31 {dimension_numbers = #tpu.dot_dimension_numbers<[1], [0], [0], [1], [0, 0, 1, 1], [], []>} : vector<16x128xbf16>, vector<128x128xbf16>, vector<16x128xf32> -> vector<16x128xf32>
    %39 = arith.addf %33, %38 : vector<16x128xf32>
    %c0_32 = arith.constant 0 : index
    %c0_33 = arith.constant 0 : index
    %40 = vector.load %arg6[%c0_32, %c0_33] : memref<1x128xf32, #tpu.memory_space<vmem>>, vector<1x128xf32>
    %41 = vector.broadcast %40 : vector<1x128xf32> to vector<16x128xf32>
    %42 = arith.mulf %39, %41 : vector<16x128xf32>
    %c0_34 = arith.constant 0 : index
    %c0_35 = arith.constant 0 : index
    %43 = vector.load %arg7[%c0_34, %c0_35] : memref<1x128xf32, #tpu.memory_space<vmem>>, vector<1x128xf32>
    %44 = vector.broadcast %43 : vector<1x128xf32> to vector<16x128xf32>
    %45 = arith.addf %42, %44 : vector<16x128xf32>
    %cst_36 = arith.constant 0.000000e+00 : f32
    %46 = vector.broadcast %cst_36 : f32 to vector<16x128xf32>
    %47 = arith.cmpf oge, %45, %46 : vector<16x128xf32>
    %48 = vector.broadcast %1 : f32 to vector<16x128xf32>
    %49 = arith.mulf %48, %45 : vector<16x128xf32>
    %50 = arith.select %47, %45, %49 : vector<16x128xi1>, vector<16x128xf32>
    %51 = arith.truncf %50 : vector<16x128xf32> to vector<16x128xbf16>
    %c0_37 = arith.constant 0 : index
    %c0_38 = arith.constant 0 : index
    %52 = vector.load %arg8[%c0_37, %c0_38] : memref<128x256xbf16, #tpu.memory_space<vmem>>, vector<128x256xbf16>
    %cst_39 = arith.constant dense<0.000000e+00> : vector<16x256xf32>
    %53 = tpu.matmul %51, %52, %cst_39 {dimension_numbers = #tpu.dot_dimension_numbers<[1], [0], [0], [1], [0, 0, 1, 1], [], []>} : vector<16x128xbf16>, vector<128x256xbf16>, vector<16x256xf32> -> vector<16x256xf32>
    %c0_40 = arith.constant 0 : index
    %c0_41 = arith.constant 0 : index
    %54 = vector.load %arg9[%c0_40, %c0_41] : memref<1x256xf32, #tpu.memory_space<vmem>>, vector<1x256xf32>
    %55 = vector.broadcast %54 : vector<1x256xf32> to vector<16x256xf32>
    %56 = arith.mulf %53, %55 : vector<16x256xf32>
    %c0_42 = arith.constant 0 : index
    %c0_43 = arith.constant 0 : index
    %57 = vector.load %arg10[%c0_42, %c0_43] : memref<1x256xf32, #tpu.memory_space<vmem>>, vector<1x256xf32>
    %58 = vector.broadcast %57 : vector<1x256xf32> to vector<16x256xf32>
    %59 = arith.addf %56, %58 : vector<16x256xf32>
    %60 = arith.addf %3, %59 : vector<16x256xf32>
    %cst_44 = arith.constant 0.000000e+00 : f32
    %61 = vector.broadcast %cst_44 : f32 to vector<16x256xf32>
    %62 = arith.cmpf oge, %60, %61 : vector<16x256xf32>
    %63 = vector.broadcast %2 : f32 to vector<16x256xf32>
    %64 = arith.mulf %63, %60 : vector<16x256xf32>
    %65 = arith.select %62, %60, %64 : vector<16x256xi1>, vector<16x256xf32>
    %c0_45 = arith.constant 0 : index
    %c0_46 = arith.constant 0 : index
    %66 = vector.load %arg12[%c0_45, %c0_46] : memref<16x256xf32, #tpu.memory_space<vmem>>, vector<16x256xf32>
    tpu.vector_store %arg12[%c0_45, %c0_46], %65 {strides = array<i32>} : memref<16x256xf32, #tpu.memory_space<vmem>>, vector<16x256xf32>,
    return
  }
  func.func @transform_0(%arg0: i32) -> (i32, i32) {
    %c0_i32 = arith.constant 0 : i32
    %c0_i32_0 = arith.constant 0 : i32
    return %arg0, %c0_i32 : i32, i32
  }
  func.func @transform_1(%arg0: i32) -> (i32, i32) {
    %c0_i32 = arith.constant 0 : i32
    %c0_i32_0 = arith.constant 0 : i32
    %c0_i32_1 = arith.constant 0 : i32
    return %c0_i32, %c0_i32_0 : i32, i32
  }
  func.func @transform_2(%arg0: i32) -> (i32, i32) {
    %c0_i32 = arith.constant 0 : i32
    %c0_i32_0 = arith.constant 0 : i32
    %c0_i32_1 = arith.constant 0 : i32
    return %c0_i32, %c0_i32_0 : i32, i32
  }
  func.func @transform_3(%arg0: i32) -> (i32, i32) {
    %c0_i32 = arith.constant 0 : i32
    %c0_i32_0 = arith.constant 0 : i32
    %c0_i32_1 = arith.constant 0 : i32
    return %c0_i32, %c0_i32_0 : i32, i32
  }
  func.func @transform_4(%arg0: i32) -> (i32, i32, i32) {
    %c0_i32 = arith.constant 0 : i32
    %c0_i32_0 = arith.constant 0 : i32
    %c0_i32_1 = arith.constant 0 : i32
    %c0_i32_2 = arith.constant 0 : i32
    return %c0_i32, %c0_i32_0, %c0_i32_1 : i32, i32, i32
  }
  func.func @transform_5(%arg0: i32) -> (i32, i32) {
    %c0_i32 = arith.constant 0 : i32
    %c0_i32_0 = arith.constant 0 : i32
    %c0_i32_1 = arith.constant 0 : i32
    return %c0_i32, %c0_i32_0 : i32, i32
  }
  func.func @transform_6(%arg0: i32) -> (i32, i32) {
    %c0_i32 = arith.constant 0 : i32
    %c0_i32_0 = arith.constant 0 : i32
    %c0_i32_1 = arith.constant 0 : i32
    return %c0_i32, %c0_i32_0 : i32, i32
  }
  func.func @transform_7(%arg0: i32) -> (i32, i32) {
    %c0_i32 = arith.constant 0 : i32
    %c0_i32_0 = arith.constant 0 : i32
    %c0_i32_1 = arith.constant 0 : i32
    return %c0_i32, %c0_i32_0 : i32, i32
  }
  func.func @transform_8(%arg0: i32) -> (i32, i32) {
    %c0_i32 = arith.constant 0 : i32
    %c0_i32_0 = arith.constant 0 : i32
    %c0_i32_1 = arith.constant 0 : i32
    return %c0_i32, %c0_i32_0 : i32, i32
  }
  func.func @transform_9(%arg0: i32) -> (i32, i32) {
    %c0_i32 = arith.constant 0 : i32
    %c0_i32_0 = arith.constant 0 : i32
    %c0_i32_1 = arith.constant 0 : i32
    return %c0_i32, %c0_i32_0 : i32, i32
  }
  func.func @transform_10(%arg0: i32) -> i32 {
    %c0_i32 = arith.constant 0 : i32
    %c0_i32_0 = arith.constant 0 : i32
    return %c0_i32 : i32
  }
  func.func @transform_11(%arg0: i32) -> (i32, i32) {
    %c0_i32 = arith.constant 0 : i32
    %c0_i32_0 = arith.constant 0 : i32
    return %arg0, %c0_i32 : i32, i32
  }
}

</mosaic_0001>

<llo_original>
// kernel: tpu_custom_call.1
$region0: #{tpu_custom_call.1}
  #allocation0 [shape = 'u32[]', space=smem, size = 0x4, offset = 0x4, fixed_abs, tag = 'smem constant byte address 0x4 - core index']
  #allocation1 [shape = 'u32[72,128]{1,0:T(1,128)}', space=vmem, size = 0x9000, scoped, tag = 'internal scratch']
  #allocation2 [shape = 'f32[20,128]{1,0:T(8,128)}', space=vmem, size = 0x3000, scoped, tag = 'scratch operand']
  %s0 = inlined_call_operand.hbm [shape: f32[32,256], index: 0, kind: input, shape index: {}]
  %s1 = inlined_call_operand.hbm [shape: bf16[256,128], index: 1, kind: input, shape index: {}]
  %s2 = inlined_call_operand.hbm [shape: f32[1,128], index: 2, kind: input, shape index: {}]
  %s3 = inlined_call_operand.hbm [shape: f32[1,128], index: 3, kind: input, shape index: {}]
  %s4 = inlined_call_operand.hbm [shape: bf16[3,128,128], index: 4, kind: input, shape index: {}]
  %s5 = inlined_call_operand.hbm [shape: f32[1,128], index: 5, kind: input, shape index: {}]
  %s6 = inlined_call_operand.vmem [shape: f32[1,128], index: 6, kind: input, shape index: {}]
  %s7 = inlined_call_operand.hbm [shape: bf16[128,256], index: 7, kind: input, shape index: {}]
  %s8 = inlined_call_operand.vmem [shape: f32[1,256], index: 8, kind: input, shape index: {}]
  %s9 = inlined_call_operand.vmem [shape: f32[1,256], index: 9, kind: input, shape index: {}]
  %s10 = inlined_call_operand.vmem [shape: f32[3], index: 10, kind: input, shape index: {}]
  %s11 = inlined_call_operand.hbm [shape: f32[32,256], index: 11, kind: output, shape index: {}]
  %s12 = sld [smem:[#allocation0]]
  $region109: #{tpu_custom_call.1} parent=0
    _
  %s14 = ssub.s32 1, %s12
  %s15 = scalar_select 0, %s14, %s12
  $region1: #{tpu_custom_call.1} parent=0
    #allocation3 [shape = 'u8[32768]{0}', space=vmem, size = 0x8000, scoped, tag = 'input window, operand 0']
    #allocation4 [shape = 's32[2]{0}', space=sflag, size = 0x8, scoped, tag = 'scoped memory for tpu_custom_call.1']
    #allocation5 [shape = 's32[2]{0}', space=sflag, size = 0x8, scoped, tag = 'scoped memory for tpu_custom_call.1']
    #allocation6 [shape = 's32[2]{0}', space=sflag, size = 0x8, scoped, tag = 'scoped memory for tpu_custom_call.1']
    #allocation7 [shape = 'u8[65536]{0}', space=vmem, size = 0x10000, scoped, tag = 'input window, operand 1, single buffered']
    #allocation8 [shape = 's32[1]{0}', space=sflag, size = 0x4, scoped, tag = 'scoped memory for tpu_custom_call.1']
    #allocation9 [shape = 'u8[512]{0}', space=vmem, size = 0x400, scoped, tag = 'input window, operand 2, single buffered']
    #allocation10 [shape = 'u8[512]{0}', space=vmem, size = 0x400, scoped, tag = 'input window, operand 3, single buffered']
    #allocation11 [shape = 's32[1]{0}', space=sflag, size = 0x4, scoped, tag = 'scoped memory for tpu_custom_call.1']
    #allocation12 [shape = 'u8[98304]{0}', space=vmem, size = 0x18000, scoped, tag = 'input window, operand 4, single buffered']
    #allocation13 [shape = 'u8[512]{0}', space=vmem, size = 0x400, scoped, tag = 'input window, operand 5, single buffered']
    #allocation14 [shape = 's32[1]{0}', space=sflag, size = 0x4, scoped, tag = 'scoped memory for tpu_custom_call.1']
    #allocation15 [shape = 'u8[65536]{0}', space=vmem, size = 0x10000, scoped, tag = 'input window, operand 7, single buffered']
    #allocation16 [shape = 'u8[512]{0}', space=smem, size = 0x200, scoped, tag = 'input window, operand 10, single buffered']
    #allocation17 [shape = 'u8[32768]{0}', space=vmem, size = 0x8000, scoped, tag = 'output window, operand 0']
    %16 = vsyncpa [#allocation4], 0
    %s17 = scalar_lea.sflag [#allocation4], 1
    %18 = vsyncpa %s17, 0
    %19 = vsyncpa [#allocation8], 0
    %20 = vsyncpa [#allocation11], 0
    %21 = vsyncpa [#allocation14], 0
    %22 = vsyncpa [#allocation6], 0
    %23 = vsyncpa [#allocation5], 0
    %s24 = scalar_lea.sflag [#allocation5], 1
    %25 = vsyncpa %s24, 0
    loop: start=0, step=1, limit=4
    $region2: #{tpu_custom_call.1} parent=1 // loop_pre_header
      _
    $region3: #{tpu_custom_call.1} parent=1 // loop_header
      %s27 = sphi 0, %s31
      %p28 = scmp.ge.s32.totalorder %s27, 4
      %s37 = sphi 0, %s39
      %s40 = sphi 0, %s37
      %s41 = sphi 0, %s40
      %s57 = sphi 0, %s41
      %s61 = sphi 0, %s61
      %s63 = sphi 0, %s61
      %s64 = sphi 0, %s63
      %s78 = sphi 0, %s64
      %s82 = sphi 0, %s82
      %s84 = sphi 0, %s82
      %s85 = sphi 0, %s84
      %s99 = sphi 0, %s85
      %s103 = sphi 0, %s103
      %s105 = sphi 0, %s103
      %s106 = sphi 0, %s105
      %s120 = sphi 0, %s106
      %s124 = sphi 0, %s124
      %s126 = sphi 0, %s124
      %s127 = sphi 0, %s126
      %s141 = sphi 0, %s127
      %s145 = sphi 0, %s145
      %s147 = sphi 0, %s145
      %s148 = sphi 0, %s147
      %s162 = sphi 0, %s148
      %s166 = sphi 0, %s166
      %s168 = sphi 0, %s166
      %s169 = sphi 0, %s168
      %s183 = sphi 0, %s169
      %s187 = sphi 0, %s187
      %s189 = sphi 0, %s187
      %s190 = sphi 0, %s189
      %s204 = sphi 0, %s190
      %s208 = sphi 0, %s208
      %s210 = sphi 0, %s208
      %s211 = sphi 0, %s210
      %s225 = sphi 0, %s211
      %s229 = sphi 0, %s229
      %s231 = sphi 0, %s229
      %s232 = sphi 0, %s231
      %s246 = sphi 0, %s232
      %s250 = sphi 0, %s250
      %s252 = sphi 0, %s250
      %s253 = sphi 0, %s252
      %s267 = sphi 0, %s253
      %s273 = sphi 0, %s275
      %s276 = sphi 0, %s273
      %s277 = sphi 0, %s276
      %s293 = sphi 0, %s277
    $region4: #{tpu_custom_call.1} parent=1 // loop_header_branch
      %30 = sbr.rel (%p28) target = $region8
    $region5: #{tpu_custom_call.1} parent=1 // loop_body
      %s32 = ssub.s32 %s27, 1
      %s33 = ssub.s32 %s27, 2
      %s34 = sadd.s32 %s27, 1
      %s35 = ssub.s32 %s27, %s34
      %p36 = scmp.eq.s32.totalorder %s35, 0
      %s38 = sadd.s32 %s37, 1
      %s39 = scalar_select %p36, %s37, %s38
      %p42 = pneg %p36
      %p43 = scmp.eq.s32.totalorder %s27, 1
      %p44 = por %p42, %p43
      %p45 = scmp.ne.s32.totalorder %s37, %s40
      %p46 = scmp.eq.s32.totalorder %s27, 0
      %p47 = por %p45, %p46
      %p48 = scmp.ne.s32.totalorder %s37, %s40
      %p49 = scmp.eq.s32.totalorder %s32, 1
      %p50 = por %p48, %p49
      %p51 = scmp.ne.s32.totalorder %s40, %s41
      %p52 = scmp.eq.s32.totalorder %s32, 0
      %p53 = por %p51, %p52
      %p54 = scmp.ne.s32.totalorder %s40, %s41
      %p55 = scmp.eq.s32.totalorder %s33, 1
      %p56 = por %p54, %p55
      %p58 = scmp.ne.s32.totalorder %s41, %s57
      %p59 = scmp.eq.s32.totalorder %s33, 0
      %p60 = por %p58, %p59
      %s62 = sadd.s32 %s61, 1
      %p65 = scmp.eq.s32.totalorder %s27, 1
      %p66 = scmp.ne.s32.totalorder %s61, %s63
      %p67 = scmp.eq.s32.totalorder %s27, 0
      %p68 = por %p66, %p67
      %p69 = scmp.ne.s32.totalorder %s61, %s63
      %p70 = scmp.eq.s32.totalorder %s32, 1
      %p71 = por %p69, %p70
      %p72 = scmp.ne.s32.totalorder %s63, %s64
      %p73 = scmp.eq.s32.totalorder %s32, 0
      %p74 = por %p72, %p73
      %p75 = scmp.ne.s32.totalorder %s63, %s64
      %p76 = scmp.eq.s32.totalorder %s33, 1
      %p77 = por %p75, %p76
      %p79 = scmp.ne.s32.totalorder %s64, %s78
      %p80 = scmp.eq.s32.totalorder %s33, 0
      %p81 = por %p79, %p80
      %s83 = sadd.s32 %s82, 1
      %p86 = scmp.eq.s32.totalorder %s27, 1
      %p87 = scmp.ne.s32.totalorder %s82, %s84
      %p88 = scmp.eq.s32.totalorder %s27, 0
      %p89 = por %p87, %p88
      %p90 = scmp.ne.s32.totalorder %s82, %s84
      %p91 = scmp.eq.s32.totalorder %s32, 1
      %p92 = por %p90, %p91
      %p93 = scmp.ne.s32.totalorder %s84, %s85
      %p94 = scmp.eq.s32.totalorder %s32, 0
      %p95 = por %p93, %p94
      %p96 = scmp.ne.s32.totalorder %s84, %s85
      %p97 = scmp.eq.s32.totalorder %s33, 1
      %p98 = por %p96, %p97
      %p100 = scmp.ne.s32.totalorder %s85, %s99
      %p101 = scmp.eq.s32.totalorder %s33, 0
      %p102 = por %p100, %p101
      %s104 = sadd.s32 %s103, 1
      %p107 = scmp.eq.s32.totalorder %s27, 1
      %p108 = scmp.ne.s32.totalorder %s103, %s105
      %p109 = scmp.eq.s32.totalorder %s27, 0
      %p110 = por %p108, %p109
      %p111 = scmp.ne.s32.totalorder %s103, %s105
      %p112 = scmp.eq.s32.totalorder %s32, 1
      %p113 = por %p111, %p112
      %p114 = scmp.ne.s32.totalorder %s105, %s106
      %p115 = scmp.eq.s32.totalorder %s32, 0
      %p116 = por %p114, %p115
      %p117 = scmp.ne.s32.totalorder %s105, %s106
      %p118 = scmp.eq.s32.totalorder %s33, 1
      %p119 = por %p117, %p118
      %p121 = scmp.ne.s32.totalorder %s106, %s120
      %p122 = scmp.eq.s32.totalorder %s33, 0
      %p123 = por %p121, %p122
      %s125 = sadd.s32 %s124, 1
      %p128 = scmp.eq.s32.totalorder %s27, 1
      %p129 = scmp.ne.s32.totalorder %s124, %s126
      %p130 = scmp.eq.s32.totalorder %s27, 0
      %p131 = por %p129, %p130
      %p132 = scmp.ne.s32.totalorder %s124, %s126
      %p133 = scmp.eq.s32.totalorder %s32, 1
      %p134 = por %p132, %p133
      %p135 = scmp.ne.s32.totalorder %s126, %s127
      %p136 = scmp.eq.s32.totalorder %s32, 0
      %p137 = por %p135, %p136
      %p138 = scmp.ne.s32.totalorder %s126, %s127
      %p139 = scmp.eq.s32.totalorder %s33, 1
      %p140 = por %p138, %p139
      %p142 = scmp.ne.s32.totalorder %s127, %s141
      %p143 = scmp.eq.s32.totalorder %s33, 0
      %p144 = por %p142, %p143
      %s146 = sadd.s32 %s145, 1
      %p149 = scmp.eq.s32.totalorder %s27, 1
      %p150 = scmp.ne.s32.totalorder %s145, %s147
      %p151 = scmp.eq.s32.totalorder %s27, 0
      %p152 = por %p150, %p151
      %p153 = scmp.ne.s32.totalorder %s145, %s147
      %p154 = scmp.eq.s32.totalorder %s32, 1
      %p155 = por %p153, %p154
      %p156 = scmp.ne.s32.totalorder %s147, %s148
      %p157 = scmp.eq.s32.totalorder %s32, 0
      %p158 = por %p156, %p157
      %p159 = scmp.ne.s32.totalorder %s147, %s148
      %p160 = scmp.eq.s32.totalorder %s33, 1
      %p161 = por %p159, %p160
      %p163 = scmp.ne.s32.totalorder %s148, %s162
      %p164 = scmp.eq.s32.totalorder %s33, 0
      %p165 = por %p163, %p164
      %s167 = sadd.s32 %s166, 1
      %p170 = scmp.eq.s32.totalorder %s27, 1
      %p171 = scmp.ne.s32.totalorder %s166, %s168
      %p172 = scmp.eq.s32.totalorder %s27, 0
      %p173 = por %p171, %p172
      %p174 = scmp.ne.s32.totalorder %s166, %s168
      %p175 = scmp.eq.s32.totalorder %s32, 1
      %p176 = por %p174, %p175
      %p177 = scmp.ne.s32.totalorder %s168, %s169
      %p178 = scmp.eq.s32.totalorder %s32, 0
      %p179 = por %p177, %p178
      %p180 = scmp.ne.s32.totalorder %s168, %s169
      %p181 = scmp.eq.s32.totalorder %s33, 1
      %p182 = por %p180, %p181
      %p184 = scmp.ne.s32.totalorder %s169, %s183
      %p185 = scmp.eq.s32.totalorder %s33, 0
      %p186 = por %p184, %p185
      %s188 = sadd.s32 %s187, 1
      %p191 = scmp.eq.s32.totalorder %s27, 1
      %p192 = scmp.ne.s32.totalorder %s187, %s189
      %p193 = scmp.eq.s32.totalorder %s27, 0
      %p194 = por %p192, %p193
      %p195 = scmp.ne.s32.totalorder %s187, %s189
      %p196 = scmp.eq.s32.totalorder %s32, 1
      %p197 = por %p195, %p196
      %p198 = scmp.ne.s32.totalorder %s189, %s190
      %p199 = scmp.eq.s32.totalorder %s32, 0
      %p200 = por %p198, %p199
      %p201 = scmp.ne.s32.totalorder %s189, %s190
      %p202 = scmp.eq.s32.totalorder %s33, 1
      %p203 = por %p201, %p202
      %p205 = scmp.ne.s32.totalorder %s190, %s204
      %p206 = scmp.eq.s32.totalorder %s33, 0
      %p207 = por %p205, %p206
      %s209 = sadd.s32 %s208, 1
      %p212 = scmp.eq.s32.totalorder %s27, 1
      %p213 = scmp.ne.s32.totalorder %s208, %s210
      %p214 = scmp.eq.s32.totalorder %s27, 0
      %p215 = por %p213, %p214
      %p216 = scmp.ne.s32.totalorder %s208, %s210
      %p217 = scmp.eq.s32.totalorder %s32, 1
      %p218 = por %p216, %p217
      %p219 = scmp.ne.s32.totalorder %s210, %s211
      %p220 = scmp.eq.s32.totalorder %s32, 0
      %p221 = por %p219, %p220
      %p222 = scmp.ne.s32.totalorder %s210, %s211
      %p223 = scmp.eq.s32.totalorder %s33, 1
      %p224 = por %p222, %p223
      %p226 = scmp.ne.s32.totalorder %s211, %s225
      %p227 = scmp.eq.s32.totalorder %s33, 0
      %p228 = por %p226, %p227
      %s230 = sadd.s32 %s229, 1
      %p233 = scmp.eq.s32.totalorder %s27, 1
      %p234 = scmp.ne.s32.totalorder %s229, %s231
      %p235 = scmp.eq.s32.totalorder %s27, 0
      %p236 = por %p234, %p235
      %p237 = scmp.ne.s32.totalorder %s229, %s231
      %p238 = scmp.eq.s32.totalorder %s32, 1
      %p239 = por %p237, %p238
      %p240 = scmp.ne.s32.totalorder %s231, %s232
      %p241 = scmp.eq.s32.totalorder %s32, 0
      %p242 = por %p240, %p241
      %p243 = scmp.ne.s32.totalorder %s231, %s232
      %p244 = scmp.eq.s32.totalorder %s33, 1
      %p245 = por %p243, %p244
      %p247 = scmp.ne.s32.totalorder %s232, %s246
      %p248 = scmp.eq.s32.totalorder %s33, 0
      %p249 = por %p247, %p248
      %s251 = sadd.s32 %s250, 1
      %p254 = scmp.eq.s32.totalorder %s27, 1
      %p255 = scmp.ne.s32.totalorder %s250, %s252
      %p256 = scmp.eq.s32.totalorder %s27, 0
      %p257 = por %p255, %p256
      %p258 = scmp.ne.s32.totalorder %s250, %s252
      %p259 = scmp.eq.s32.totalorder %s32, 1
      %p260 = por %p258, %p259
      %p261 = scmp.ne.s32.totalorder %s252, %s253
      %p262 = scmp.eq.s32.totalorder %s32, 0
      %p263 = por %p261, %p262
      %p264 = scmp.ne.s32.totalorder %s252, %s253
      %p265 = scmp.eq.s32.totalorder %s33, 1
      %p266 = por %p264, %p265
      %p268 = scmp.ne.s32.totalorder %s253, %s267
      %p269 = scmp.eq.s32.totalorder %s33, 0
      %p270 = por %p268, %p269
      %s271 = ssub.s32 %s27, %s34
      %p272 = scmp.eq.s32.totalorder %s271, 0
      %s274 = sadd.s32 %s273, 1
      %s275 = scalar_select %p272, %s273, %s274
      %p278 = pneg %p272
      %p279 = scmp.eq.s32.totalorder %s27, 1
      %p280 = por %p278, %p279
      %p281 = scmp.ne.s32.totalorder %s273, %s276
      %p282 = scmp.eq.s32.totalorder %s27, 0
      %p283 = por %p281, %p282
      %p284 = scmp.ne.s32.totalorder %s273, %s276
      %p285 = scmp.eq.s32.totalorder %s32, 1
      %p286 = por %p284, %p285
      %p287 = scmp.ne.s32.totalorder %s276, %s277
      %p288 = scmp.eq.s32.totalorder %s32, 0
      %p289 = por %p287, %p288
      %p290 = scmp.ne.s32.totalorder %s276, %s277
      %p291 = scmp.eq.s32.totalorder %s33, 1
      %p292 = por %p290, %p291
      %p294 = scmp.ne.s32.totalorder %s277, %s293
      %p295 = scmp.eq.s32.totalorder %s33, 0
      %p296 = por %p294, %p295
      %p297 = scmp.le.s32.totalorder 1, %s27
      %p298 = scmp.lt.s32.totalorder %s27, 3
      %p299 = pnand %p297, %p298
      %p300 = pneg %p299
      // Predicated region
      $region9: #{tpu_custom_call.1} parent=5 // pred_check
        _
      $region10: #{tpu_custom_call.1} parent=5 // pred_check_branch
        %302 = sbr.rel (%p299) target = $region12
      $region11: #{tpu_custom_call.1} parent=5 // pred_region
        %s303 = ssub.s32 %s27, 1
        // Predicated region
        $region13: #{tpu_custom_call.1} parent=11 // pred_check
          %p304 = pneg %p74
        $region14: #{tpu_custom_call.1} parent=11 // pred_check_branch
          %306 = sbr.rel (%p304) target = $region16
        $region15: #{tpu_custom_call.1} parent=11 // pred_region
          %308 = vsyncadd [#allocation8], 0
          %s309 = sshll.u32 %s1, 4
          %s310 = int_to_ptr.hbm [resolvable:$true] %s309
          %s311 = sshll.u32 [#allocation7], 4
          %s312 = int_to_ptr.vmem [resolvable:$true] %s311
          %317 = dma.hbm_to_vmem [thread:$0]  %s310, 2048, %s312, [#allocation8], 64, 64, 4
        $region16: #{tpu_custom_call.1} parent=11 // pred_fallthru
          _
        // Predicated region
        $region17: #{tpu_custom_call.1} parent=11 // pred_check
          %p318 = pneg %p95
        $region18: #{tpu_custom_call.1} parent=11 // pred_check_branch
          %320 = sbr.rel (%p318) target = $region20
        $region19: #{tpu_custom_call.1} parent=11 // pred_region
          %322 = vsyncadd [#allocation8], 0
          %s324 = sshll.u32 %s2, 4
          %s325 = int_to_ptr.hbm [resolvable:$true] %s324
          %s326 = sshll.u32 [#allocation9], 4
          %s327 = int_to_ptr.vmem [resolvable:$true] %s326
          %329 = dma.hbm_to_vmem [thread:$0]  %s325, 16, %s327, [#allocation8]
        $region20: #{tpu_custom_call.1} parent=11 // pred_fallthru
          _
        // Predicated region
        $region21: #{tpu_custom_call.1} parent=11 // pred_check
          %p330 = pneg %p116
        $region22: #{tpu_custom_call.1} parent=11 // pred_check_branch
          %332 = sbr.rel (%p330) target = $region24
        $region23: #{tpu_custom_call.1} parent=11 // pred_region
          %334 = vsyncadd [#allocation11], 0
          %s336 = sshll.u32 %s3, 4
          %s337 = int_to_ptr.hbm [resolvable:$true] %s336
          %s338 = sshll.u32 [#allocation10], 4
          %s339 = int_to_ptr.vmem [resolvable:$true] %s338
          %341 = dma.hbm_to_vmem [thread:$0]  %s337, 16, %s339, [#allocation11]
        $region24: #{tpu_custom_call.1} parent=11 // pred_fallthru
          _
        // Predicated region
        $region25: #{tpu_custom_call.1} parent=11 // pred_check
          %p342 = pneg %p137
        $region26: #{tpu_custom_call.1} parent=11 // pred_check_branch
          %344 = sbr.rel (%p342) target = $region28
        $region27: #{tpu_custom_call.1} parent=11 // pred_region
          %346 = vsyncadd [#allocation11], 0
          %s347 = sshll.u32 %s4, 4
          %s348 = int_to_ptr.hbm [resolvable:$true] %s347
          %s349 = sshll.u32 [#allocation12], 4
          %s350 = int_to_ptr.vmem [resolvable:$true] %s349
          %355 = dma.hbm_to_vmem [thread:$0]  %s348, 3072, %s350, [#allocation11], 64, 64, 4
        $region28: #{tpu_custom_call.1} parent=11 // pred_fallthru
          _
        // Predicated region
        $region29: #{tpu_custom_call.1} parent=11 // pred_check
          %p356 = pneg %p158
        $region30: #{tpu_custom_call.1} parent=11 // pred_check_branch
          %358 = sbr.rel (%p356) target = $region32
        $region31: #{tpu_custom_call.1} parent=11 // pred_region
          %360 = vsyncadd [#allocation14], 0
          %s362 = sshll.u32 %s5, 4
          %s363 = int_to_ptr.hbm [resolvable:$true] %s362
          %s364 = sshll.u32 [#allocation13], 4
          %s365 = int_to_ptr.vmem [resolvable:$true] %s364
          %367 = dma.hbm_to_vmem [thread:$0]  %s363, 16, %s365, [#allocation14]
        $region32: #{tpu_custom_call.1} parent=11 // pred_fallthru
          _
        // Predicated region
        $region33: #{tpu_custom_call.1} parent=11 // pred_check
          %p368 = pneg %p179
        $region34: #{tpu_custom_call.1} parent=11 // pred_check_branch
          %370 = sbr.rel (%p368) target = $region36
        $region35: #{tpu_custom_call.1} parent=11 // pred_region
          _
        $region36: #{tpu_custom_call.1} parent=11 // pred_fallthru
          _
        // Predicated region
        $region37: #{tpu_custom_call.1} parent=11 // pred_check
          %p371 = pneg %p200
        $region38: #{tpu_custom_call.1} parent=11 // pred_check_branch
          %373 = sbr.rel (%p371) target = $region40
        $region39: #{tpu_custom_call.1} parent=11 // pred_region
          %375 = vsyncadd [#allocation14], 0
          %s376 = sshll.u32 %s7, 4
          %s377 = int_to_ptr.hbm [resolvable:$true] %s376
          %s378 = sshll.u32 [#allocation15], 4
          %s379 = int_to_ptr.vmem [resolvable:$true] %s378
          %384 = dma.hbm_to_vmem [thread:$0]  %s377, 2048, %s379, [#allocation14], 128, 128, 8
        $region40: #{tpu_custom_call.1} parent=11 // pred_fallthru
          _
        // Predicated region
        $region41: #{tpu_custom_call.1} parent=11 // pred_check
          %p385 = pneg %p221
        $region42: #{tpu_custom_call.1} parent=11 // pred_check_branch
          %387 = sbr.rel (%p385) target = $region44
        $region43: #{tpu_custom_call.1} parent=11 // pred_region
          _
        $region44: #{tpu_custom_call.1} parent=11 // pred_fallthru
          _
        // Predicated region
        $region45: #{tpu_custom_call.1} parent=11 // pred_check
          %p388 = pneg %p242
        $region46: #{tpu_custom_call.1} parent=11 // pred_check_branch
          %390 = sbr.rel (%p388) target = $region48
        $region47: #{tpu_custom_call.1} parent=11 // pred_region
          _
        $region48: #{tpu_custom_call.1} parent=11 // pred_fallthru
          _
        // Predicated region
        $region49: #{tpu_custom_call.1} parent=11 // pred_check
          %p391 = pneg %p263
        $region50: #{tpu_custom_call.1} parent=11 // pred_check_branch
          %393 = sbr.rel (%p391) target = $region52
        $region51: #{tpu_custom_call.1} parent=11 // pred_region
          %395 = vsyncadd [#allocation6], 0
          %s397 = sshll.u32 %s10, 4
          %s398 = int_to_ptr.vmem [resolvable:$true] %s397
          %400 = dma.vmem_to_smem %s398, 16, [#allocation16], [#allocation6]
        $region52: #{tpu_custom_call.1} parent=11 // pred_fallthru
          _
      $region12: #{tpu_custom_call.1} parent=5 // pred_fallthru
        _
      %p401 = scmp.lt.s32.totalorder %s27, 2
      // Predicated region
      $region53: #{tpu_custom_call.1} parent=5 // pred_check
        %p402 = pneg %p401
      $region54: #{tpu_custom_call.1} parent=5 // pred_check_branch
        %404 = sbr.rel (%p402) target = $region56
      $region55: #{tpu_custom_call.1} parent=5 // pred_region
        // Predicated region
        $region57: #{tpu_custom_call.1} parent=55 // pred_check
          %p405 = pneg %p47
        $region58: #{tpu_custom_call.1} parent=55 // pred_check_branch
          %407 = sbr.rel (%p405) target = $region60
        $region59: #{tpu_custom_call.1} parent=55 // pred_region
          %s408 = sand.u32 %s37, 1
          %s409 = scalar_lea.sflag [#allocation4], %s408
          %s410 = sand.u32 %s37, 1
          %s411 = smul.addr %s410, 32
          %s412 = scalar_lea.vmem [#allocation3], %s411
          %s413 = smul.u32 2, %s27
          %415 = vsyncadd %s409, 0
          %s416 = smul.addr %s413, 2
          %s417 = smul.addr %s416, 8
          %s418 = scalar_lea.hbm %s0, %s417
          %s419 = sshll.u32 %s418, 4
          %s420 = int_to_ptr.hbm [resolvable:$true] %s419
          %s421 = sshll.u32 %s412, 4
          %s422 = int_to_ptr.vmem [resolvable:$true] %s421
          %427 = dma.hbm_to_vmem [thread:$0]  %s420, 512, %s422, %s409, 256, 256, 16
        $region60: #{tpu_custom_call.1} parent=55 // pred_fallthru
          _
      $region56: #{tpu_custom_call.1} parent=5 // pred_fallthru
        _
      %p428 = scmp.le.s32.totalorder 1, %s27
      %p429 = scmp.lt.s32.totalorder %s27, 3
      %p430 = pnand %p428, %p429
      %p431 = pneg %p430
      // Predicated region
      $region61: #{tpu_custom_call.1} parent=5 // pred_check
        _
      $region62: #{tpu_custom_call.1} parent=5 // pred_check_branch
        %433 = sbr.rel (%p430) target = $region64
      $region63: #{tpu_custom_call.1} parent=5 // pred_region
        %s434 = ssub.s32 %s27, 1
        %s435 = sand.u32 %s40, 1
        %s436 = scalar_lea.sflag [#allocation4], %s435
        %s437 = sand.u32 %s40, 1
        %s438 = smul.addr %s437, 32
        %s439 = scalar_lea.vmem [#allocation3], %s438
        // Predicated region
        $region65: #{tpu_custom_call.1} parent=63 // pred_check
          %p440 = pneg %p53
        $region66: #{tpu_custom_call.1} parent=63 // pred_check_branch
          %442 = sbr.rel (%p440) target = $region68
        $region67: #{tpu_custom_call.1} parent=63 // pred_region
          %444 = dma.done %s436, 512
        $region68: #{tpu_custom_call.1} parent=63 // pred_fallthru
          _
        // Predicated region
        $region69: #{tpu_custom_call.1} parent=63 // pred_check
          %p445 = pneg %p74
        $region70: #{tpu_custom_call.1} parent=63 // pred_check_branch
          %447 = sbr.rel (%p445) target = $region72
        $region71: #{tpu_custom_call.1} parent=63 // pred_region
          %449 = dma.done [#allocation8], 2048
        $region72: #{tpu_custom_call.1} parent=63 // pred_fallthru
          _
        // Predicated region
        $region73: #{tpu_custom_call.1} parent=63 // pred_check
          %p450 = pneg %p95
        $region74: #{tpu_custom_call.1} parent=63 // pred_check_branch
          %452 = sbr.rel (%p450) target = $region76
        $region75: #{tpu_custom_call.1} parent=63 // pred_region
          %454 = dma.done [#allocation8], 16
        $region76: #{tpu_custom_call.1} parent=63 // pred_fallthru
          _
        // Predicated region
        $region77: #{tpu_custom_call.1} parent=63 // pred_check
          %p455 = pneg %p116
        $region78: #{tpu_custom_call.1} parent=63 // pred_check_branch
          %457 = sbr.rel (%p455) target = $region80
        $region79: #{tpu_custom_call.1} parent=63 // pred_region
          %459 = dma.done [#allocation11], 16
        $region80: #{tpu_custom_call.1} parent=63 // pred_fallthru
          _
        // Predicated region
        $region81: #{tpu_custom_call.1} parent=63 // pred_check
          %p460 = pneg %p137
        $region82: #{tpu_custom_call.1} parent=63 // pred_check_branch
          %462 = sbr.rel (%p460) target = $region84
        $region83: #{tpu_custom_call.1} parent=63 // pred_region
          %464 = dma.done [#allocation11], 3072
        $region84: #{tpu_custom_call.1} parent=63 // pred_fallthru
          _
        // Predicated region
        $region85: #{tpu_custom_call.1} parent=63 // pred_check
          %p465 = pneg %p158
        $region86: #{tpu_custom_call.1} parent=63 // pred_check_branch
          %467 = sbr.rel (%p465) target = $region88
        $region87: #{tpu_custom_call.1} parent=63 // pred_region
          %469 = dma.done [#allocation14], 16
        $region88: #{tpu_custom_call.1} parent=63 // pred_fallthru
          _
        // Predicated region
        $region89: #{tpu_custom_call.1} parent=63 // pred_check
          %p470 = pneg %p200
        $region90: #{tpu_custom_call.1} parent=63 // pred_check_branch
          %472 = sbr.rel (%p470) target = $region92
        $region91: #{tpu_custom_call.1} parent=63 // pred_region
          %474 = dma.done [#allocation14], 2048
        $region92: #{tpu_custom_call.1} parent=63 // pred_fallthru
          _
        // Predicated region
        $region93: #{tpu_custom_call.1} parent=63 // pred_check
          %p475 = pneg %p263
        $region94: #{tpu_custom_call.1} parent=63 // pred_check_branch
          %477 = sbr.rel (%p475) target = $region96
        $region95: #{tpu_custom_call.1} parent=63 // pred_region
          %479 = dma.done [#allocation6], 16
        $region96: #{tpu_custom_call.1} parent=63 // pred_fallthru
          _
        %480 = sfence
        %s481 = sand.u32 %s40, 1
        %s482 = scalar_lea.sflag [#allocation4], %s481
        %s483 = sand.u32 %s40, 1
        %s484 = smul.addr %s483, 32
        %s485 = scalar_lea.vmem [#allocation3], %s484
        %p486 = pneg %p53
        %p487 = pneg %p50
        %p488 = pneg %p74
        %p489 = pneg %p71
        %p490 = pneg %p95
        %p491 = pneg %p92
        %p492 = pneg %p116
        %p493 = pneg %p113
        %p494 = pneg %p137
        %p495 = pneg %p134
        %p496 = pneg %p158
        %p497 = pneg %p155
        %p498 = pneg %p179
        %p499 = pneg %p176
        %p500 = pneg %p200
        %p501 = pneg %p197
        %p502 = pneg %p221
        %p503 = pneg %p218
        %p504 = pneg %p242
        %p505 = pneg %p239
        %p506 = pneg %p263
        %p507 = pneg %p260
        %p508 = pneg %p289
        %p509 = pneg %p286
        %s510 = sand.u32 %s276, 1
        %s511 = scalar_lea.sflag [#allocation5], %s510
        %s512 = sand.u32 %s276, 1
        %s513 = smul.addr %s512, 32
        %s514 = scalar_lea.vmem [#allocation17], %s513
        %s515 = smul.u32 2, %s32
        %s516 = smul.u32 2, %s32
        %s517 = sld [smem:[#allocation16]]
        %s518 = sld [smem:[#allocation16 + $0x1]]
        %s519 = sld [smem:[#allocation16 + $0x2]]
        %v520 = vld [vmem:[%s439] sm:$0xff]
        %v521 = vld [vmem:[%s439 + $0x8] sm:$0xff]
        %v522 = vld [vmem:[%s439 + $0x10] sm:$0xff]
        %v523 = vld [vmem:[%s439 + $0x18] sm:$0xff]
        %v524 = vpack.c.bf16 %v522, %v520
        %v525 = vpack.c.bf16 %v523, %v521
        %v526 = vld [vmem:[#allocation7] sm:$0xf]
        %v527 = vld [vmem:[#allocation7 + $0x4] sm:$0xf]
        %v528 = vld [vmem:[#allocation7 + $0x8] sm:$0xf]
        %v529 = vld [vmem:[#allocation7 + $0xc] sm:$0xf]
        %v530 = vld [vmem:[#allocation7 + $0x10] sm:$0xf]
        %v531 = vld [vmem:[#allocation7 + $0x14] sm:$0xf]
        %v532 = vld [vmem:[#allocation7 + $0x18] sm:$0xf]
        %v533 = vld [vmem:[#allocation7 + $0x1c] sm:$0xf]
        %v534 = vld [vmem:[#allocation7 + $0x20] sm:$0xf]
        %v535 = vld [vmem:[#allocation7 + $0x24] sm:$0xf]
        %v536 = vld [vmem:[#allocation7 + $0x28] sm:$0xf]
        %v537 = vld [vmem:[#allocation7 + $0x2c] sm:$0xf]
        %v538 = vld [vmem:[#allocation7 + $0x30] sm:$0xf]
        %v539 = vld [vmem:[#allocation7 + $0x34] sm:$0xf]
        %v540 = vld [vmem:[#allocation7 + $0x38] sm:$0xf]
        %v541 = vld [vmem:[#allocation7 + $0x3c] sm:$0xf]
        %v542 = vld [vmem:[#allocation7 + $0x40] sm:$0xf]
        %v543 = vld [vmem:[#allocation7 + $0x44] sm:$0xf]
        %v544 = vld [vmem:[#allocation7 + $0x48] sm:$0xf]
        %v545 = vld [vmem:[#allocation7 + $0x4c] sm:$0xf]
        %v546 = vld [vmem:[#allocation7 + $0x50] sm:$0xf]
        %v547 = vld [vmem:[#allocation7 + $0x54] sm:$0xf]
        %v548 = vld [vmem:[#allocation7 + $0x58] sm:$0xf]
        %v549 = vld [vmem:[#allocation7 + $0x5c] sm:$0xf]
        %v550 = vld [vmem:[#allocation7 + $0x60] sm:$0xf]
        %v551 = vld [vmem:[#allocation7 + $0x64] sm:$0xf]
        %v552 = vld [vmem:[#allocation7 + $0x68] sm:$0xf]
        %v553 = vld [vmem:[#allocation7 + $0x6c] sm:$0xf]
        %v554 = vld [vmem:[#allocation7 + $0x70] sm:$0xf]
        %v555 = vld [vmem:[#allocation7 + $0x74] sm:$0xf]
        %v556 = vld [vmem:[#allocation7 + $0x78] sm:$0xf]
        %v557 = vld [vmem:[#allocation7 + $0x7c] sm:$0xf]
        %v590 = vunpack.c.l.b16 %v526
        %v591 = vunpack.c.l.b16 %v527
        %v592 = vunpack.c.l.b16 %v528
        %v593 = vunpack.c.l.b16 %v529
        %v594 = vunpack.c.l.b16 %v530
        %v595 = vunpack.c.l.b16 %v531
        %v596 = vunpack.c.l.b16 %v532
        %v597 = vunpack.c.l.b16 %v533
        %v598 = vunpack.c.l.b16 %v534
        %v599 = vunpack.c.l.b16 %v535
        %v600 = vunpack.c.l.b16 %v536
        %v601 = vunpack.c.l.b16 %v537
        %v602 = vunpack.c.l.b16 %v538
        %v603 = vunpack.c.l.b16 %v539
        %v604 = vunpack.c.l.b16 %v540
        %v605 = vunpack.c.l.b16 %v541
        %v606 = vunpack.c.l.b16 %v542
        %v607 = vunpack.c.l.b16 %v543
        %v608 = vunpack.c.l.b16 %v544
        %v609 = vunpack.c.l.b16 %v545
        %v610 = vunpack.c.l.b16 %v546
        %v611 = vunpack.c.l.b16 %v547
        %v612 = vunpack.c.l.b16 %v548
        %v613 = vunpack.c.l.b16 %v549
        %v614 = vunpack.c.l.b16 %v550
        %v615 = vunpack.c.l.b16 %v551
        %v616 = vunpack.c.l.b16 %v552
        %v617 = vunpack.c.l.b16 %v553
        %v618 = vunpack.c.l.b16 %v554
        %v619 = vunpack.c.l.b16 %v555
        %v620 = vunpack.c.l.b16 %v556
        %v621 = vunpack.c.l.b16 %v557
        %v622 = vpack.c.b16 %v591, %v590
        %v623 = vpack.c.b16 %v593, %v592
        %v624 = vpack.c.b16 %v595, %v594
        %v625 = vpack.c.b16 %v597, %v596
        %v626 = vpack.c.b16 %v599, %v598
        %v627 = vpack.c.b16 %v601, %v600
        %v628 = vpack.c.b16 %v603, %v602
        %v629 = vpack.c.b16 %v605, %v604
        %v630 = vpack.c.b16 %v607, %v606
        %v631 = vpack.c.b16 %v609, %v608
        %v632 = vpack.c.b16 %v611, %v610
        %v633 = vpack.c.b16 %v613, %v612
        %v634 = vpack.c.b16 %v615, %v614
        %v635 = vpack.c.b16 %v617, %v616
        %v636 = vpack.c.b16 %v619, %v618
        %v637 = vpack.c.b16 %v621, %v620
        %654 = vmatpush.bf16.msra.mxu0 %v629
        %655 = vmatpush.bf16.msra.mxu0 %v628
        %656 = vmatpush.bf16.msra.mxu0 %v627
        %657 = vmatpush.bf16.msra.mxu0 %v626
        %658 = vmatpush.bf16.msra.mxu0 %v625
        %659 = vmatpush.bf16.msra.mxu0 %v624
        %660 = vmatpush.bf16.msra.mxu0 %v623
        %661 = vmatpush.bf16.msra.mxu0 %v622
        %662 = vmatmul.bf16.gmra.mxu0 %v524
        %v663 = vpop.f32.mrf.mxu0
        %v664 = vadd.f32 0.0, %v663
        %v665 = vpop.f32.mrf.mxu0
        %v666 = vadd.f32 0.0, %v665
        %667 = vdwg.mxu0
        %668 = vmatpush.bf16.msra.mxu0 %v637
        %669 = vmatpush.bf16.msra.mxu0 %v636
        %670 = vmatpush.bf16.msra.mxu0 %v635
        %671 = vmatpush.bf16.msra.mxu0 %v634
        %672 = vmatpush.bf16.msra.mxu0 %v633
        %673 = vmatpush.bf16.msra.mxu0 %v632
        %674 = vmatpush.bf16.msra.mxu0 %v631
        %675 = vmatpush.bf16.msra.mxu0 %v630
        %676 = vmatmul.bf16.gmra.mxu0 %v525
        %v677 = vpop.f32.mrf.mxu0
        %v678 = vadd.f32 %v664, %v677
        %v679 = vpop.f32.mrf.mxu0
        %v680 = vadd.f32 %v666, %v679
        %681 = vdwg.mxu0
        %v682 = vld [vmem:[#allocation9] sm:$0x1]
        %v684 = vperm.slane %v682, 0
        %v686 = vmul.f32 %v678, %v684
        %v687 = vmul.f32 %v680, %v684
        %v688 = vld [vmem:[#allocation10] sm:$0x1]
        %v690 = vperm.slane %v688, 0
        %v692 = vadd.f32 %v686, %v690
        %v693 = vadd.f32 %v687, %v690
        %vm694 = vcmp.ge.f32.partialorder %v692, 0.0
        %vm695 = vcmp.ge.f32.partialorder %v693, 0.0
        %v696 = vstv %s517
        %v697 = vmul.f32 %v696, %v692
        %v698 = vmul.f32 %v696, %v693
        %v699 = vsel %vm694, %v692, %v697
        %v700 = vsel %vm695, %v693, %v698
        %701 = vst [vmem:[#allocation2] sm:$0xff] 0.0
        %702 = vst [vmem:[#allocation2 + $0x8] sm:$0xff] 0.0
        %703 = vst [vmem:[#allocation2 + $0x10] sm:$0xf] 0.0
        %704 = vst [vmem:[#allocation2 + $0x2] sm:$0xff] %v699
        %705 = vst [vmem:[#allocation2 + $0xa] sm:$0xff] %v700
        %v706 = vld [vmem:[#allocation2] sm:$0xff]
        %v707 = vld [vmem:[#allocation2 + $0x8] sm:$0xff]
        %v708 = vpack.c.bf16 %v707, %v706
        %v709 = vld [vmem:[#allocation12] sm:$0xf]
        %v710 = vld [vmem:[#allocation12 + $0x4] sm:$0xf]
        %v711 = vld [vmem:[#allocation12 + $0x8] sm:$0xf]
        %v712 = vld [vmem:[#allocation12 + $0xc] sm:$0xf]
        %v713 = vld [vmem:[#allocation12 + $0x10] sm:$0xf]
        %v714 = vld [vmem:[#allocation12 + $0x14] sm:$0xf]
        %v715 = vld [vmem:[#allocation12 + $0x18] sm:$0xf]
        %v716 = vld [vmem:[#allocation12 + $0x1c] sm:$0xf]
        %v717 = vld [vmem:[#allocation12 + $0x20] sm:$0xf]
        %v718 = vld [vmem:[#allocation12 + $0x24] sm:$0xf]
        %v719 = vld [vmem:[#allocation12 + $0x28] sm:$0xf]
        %v720 = vld [vmem:[#allocation12 + $0x2c] sm:$0xf]
        %v721 = vld [vmem:[#allocation12 + $0x30] sm:$0xf]
        %v722 = vld [vmem:[#allocation12 + $0x34] sm:$0xf]
        %v723 = vld [vmem:[#allocation12 + $0x38] sm:$0xf]
        %v724 = vld [vmem:[#allocation12 + $0x3c] sm:$0xf]
        %v725 = vld [vmem:[#allocation2 + $0x2] sm:$0xff]
        %v726 = vld [vmem:[#allocation2 + $0xa] sm:$0xff]
        %v727 = vpack.c.bf16 %v726, %v725
        %s728 = scalar_lea.vmem [#allocation12], 64
        %v729 = vld [vmem:[%s728] sm:$0xf]
        %v730 = vld [vmem:[%s728 + $0x4] sm:$0xf]
        %v731 = vld [vmem:[%s728 + $0x8] sm:$0xf]
        %v732 = vld [vmem:[%s728 + $0xc] sm:$0xf]
        %v733 = vld [vmem:[%s728 + $0x10] sm:$0xf]
        %v734 = vld [vmem:[%s728 + $0x14] sm:$0xf]
        %v735 = vld [vmem:[%s728 + $0x18] sm:$0xf]
        %v736 = vld [vmem:[%s728 + $0x1c] sm:$0xf]
        %v737 = vld [vmem:[%s728 + $0x20] sm:$0xf]
        %v738 = vld [vmem:[%s728 + $0x24] sm:$0xf]
        %v739 = vld [vmem:[%s728 + $0x28] sm:$0xf]
        %v740 = vld [vmem:[%s728 + $0x2c] sm:$0xf]
        %v741 = vld [vmem:[%s728 + $0x30] sm:$0xf]
        %v742 = vld [vmem:[%s728 + $0x34] sm:$0xf]
        %v743 = vld [vmem:[%s728 + $0x38] sm:$0xf]
        %v744 = vld [vmem:[%s728 + $0x3c] sm:$0xf]
        %v761 = vunpack.c.l.b16 %v729
        %v762 = vunpack.c.l.b16 %v730
        %v763 = vunpack.c.l.b16 %v731
        %v764 = vunpack.c.l.b16 %v732
        %v765 = vunpack.c.l.b16 %v733
        %v766 = vunpack.c.l.b16 %v734
        %v767 = vunpack.c.l.b16 %v735
        %v768 = vunpack.c.l.b16 %v736
        %v769 = vunpack.c.l.b16 %v737
        %v770 = vunpack.c.l.b16 %v738
        %v771 = vunpack.c.l.b16 %v739
        %v772 = vunpack.c.l.b16 %v740
        %v773 = vunpack.c.l.b16 %v741
        %v774 = vunpack.c.l.b16 %v742
        %v775 = vunpack.c.l.b16 %v743
        %v776 = vunpack.c.l.b16 %v744
        %v777 = vpack.c.b16 %v762, %v761
        %v778 = vpack.c.b16 %v764, %v763
        %v779 = vpack.c.b16 %v766, %v765
        %v780 = vpack.c.b16 %v768, %v767
        %v781 = vpack.c.b16 %v770, %v769
        %v782 = vpack.c.b16 %v772, %v771
        %v783 = vpack.c.b16 %v774, %v773
        %v784 = vpack.c.b16 %v776, %v775
        %793 = vmatpush.bf16.msra.mxu0 %v784
        %794 = vmatpush.bf16.msra.mxu0 %v783
        %795 = vmatpush.bf16.msra.mxu0 %v782
        %796 = vmatpush.bf16.msra.mxu0 %v781
        %797 = vmatpush.bf16.msra.mxu0 %v780
        %798 = vmatpush.bf16.msra.mxu0 %v779
        %799 = vmatpush.bf16.msra.mxu0 %v778
        %800 = vmatpush.bf16.msra.mxu0 %v777
        %801 = vmatmul.bf16.gmra.mxu0 %v727
        %v802 = vpop.f32.mrf.mxu0
        %v803 = vadd.f32 0.0, %v802
        %v804 = vpop.f32.mrf.mxu0
        %v805 = vadd.f32 0.0, %v804
        %806 = vdwg.mxu0
        %v823 = vunpack.c.l.b16 %v709
        %v824 = vunpack.c.l.b16 %v710
        %v825 = vunpack.c.l.b16 %v711
        %v826 = vunpack.c.l.b16 %v712
        %v827 = vunpack.c.l.b16 %v713
        %v828 = vunpack.c.l.b16 %v714
        %v829 = vunpack.c.l.b16 %v715
        %v830 = vunpack.c.l.b16 %v716
        %v831 = vunpack.c.l.b16 %v717
        %v832 = vunpack.c.l.b16 %v718
        %v833 = vunpack.c.l.b16 %v719
        %v834 = vunpack.c.l.b16 %v720
        %v835 = vunpack.c.l.b16 %v721
        %v836 = vunpack.c.l.b16 %v722
        %v837 = vunpack.c.l.b16 %v723
        %v838 = vunpack.c.l.b16 %v724
        %v839 = vpack.c.b16 %v824, %v823
        %v840 = vpack.c.b16 %v826, %v825
        %v841 = vpack.c.b16 %v828, %v827
        %v842 = vpack.c.b16 %v830, %v829
        %v843 = vpack.c.b16 %v832, %v831
        %v844 = vpack.c.b16 %v834, %v833
        %v845 = vpack.c.b16 %v836, %v835
        %v846 = vpack.c.b16 %v838, %v837
        %855 = vmatpush.bf16.msra.mxu0 %v846
        %856 = vmatpush.bf16.msra.mxu0 %v845
        %857 = vmatpush.bf16.msra.mxu0 %v844
        %858 = vmatpush.bf16.msra.mxu0 %v843
        %859 = vmatpush.bf16.msra.mxu0 %v842
        %860 = vmatpush.bf16.msra.mxu0 %v841
        %861 = vmatpush.bf16.msra.mxu0 %v840
        %862 = vmatpush.bf16.msra.mxu0 %v839
        %863 = vmatmul.bf16.gmra.mxu0 %v708
        %v864 = vpop.f32.mrf.mxu0
        %v865 = vadd.f32 %v803, %v864
        %v866 = vpop.f32.mrf.mxu0
        %v867 = vadd.f32 %v805, %v866
        %868 = vdwg.mxu0
        %v869 = vld [vmem:[#allocation2 + $0x4] sm:$0xff]
        %v870 = vld [vmem:[#allocation2 + $0xc] sm:$0xff]
        %v871 = vpack.c.bf16 %v870, %v869
        %s872 = scalar_lea.vmem [#allocation12], 128
        %v873 = vld [vmem:[%s872] sm:$0xf]
        %v874 = vld [vmem:[%s872 + $0x4] sm:$0xf]
        %v875 = vld [vmem:[%s872 + $0x8] sm:$0xf]
        %v876 = vld [vmem:[%s872 + $0xc] sm:$0xf]
        %v877 = vld [vmem:[%s872 + $0x10] sm:$0xf]
        %v878 = vld [vmem:[%s872 + $0x14] sm:$0xf]
        %v879 = vld [vmem:[%s872 + $0x18] sm:$0xf]
        %v880 = vld [vmem:[%s872 + $0x1c] sm:$0xf]
        %v881 = vld [vmem:[%s872 + $0x20] sm:$0xf]
        %v882 = vld [vmem:[%s872 + $0x24] sm:$0xf]
        %v883 = vld [vmem:[%s872 + $0x28] sm:$0xf]
        %v884 = vld [vmem:[%s872 + $0x2c] sm:$0xf]
        %v885 = vld [vmem:[%s872 + $0x30] sm:$0xf]
        %v886 = vld [vmem:[%s872 + $0x34] sm:$0xf]
        %v887 = vld [vmem:[%s872 + $0x38] sm:$0xf]
        %v888 = vld [vmem:[%s872 + $0x3c] sm:$0xf]
        %v905 = vunpack.c.l.b16 %v873
        %v906 = vunpack.c.l.b16 %v874
        %v907 = vunpack.c.l.b16 %v875
        %v908 = vunpack.c.l.b16 %v876
        %v909 = vunpack.c.l.b16 %v877
        %v910 = vunpack.c.l.b16 %v878
        %v911 = vunpack.c.l.b16 %v879
        %v912 = vunpack.c.l.b16 %v880
        %v913 = vunpack.c.l.b16 %v881
        %v914 = vunpack.c.l.b16 %v882
        %v915 = vunpack.c.l.b16 %v883
        %v916 = vunpack.c.l.b16 %v884
        %v917 = vunpack.c.l.b16 %v885
        %v918 = vunpack.c.l.b16 %v886
        %v919 = vunpack.c.l.b16 %v887
        %v920 = vunpack.c.l.b16 %v888
        %v921 = vpack.c.b16 %v906, %v905
        %v922 = vpack.c.b16 %v908, %v907
        %v923 = vpack.c.b16 %v910, %v909
        %v924 = vpack.c.b16 %v912, %v911
        %v925 = vpack.c.b16 %v914, %v913
        %v926 = vpack.c.b16 %v916, %v915
        %v927 = vpack.c.b16 %v918, %v917
        %v928 = vpack.c.b16 %v920, %v919
        %937 = vmatpush.bf16.msra.mxu0 %v928
        %938 = vmatpush.bf16.msra.mxu0 %v927
        %939 = vmatpush.bf16.msra.mxu0 %v926
        %940 = vmatpush.bf16.msra.mxu0 %v925
        %941 = vmatpush.bf16.msra.mxu0 %v924
        %942 = vmatpush.bf16.msra.mxu0 %v923
        %943 = vmatpush.bf16.msra.mxu0 %v922
        %944 = vmatpush.bf16.msra.mxu0 %v921
        %945 = vmatmul.bf16.gmra.mxu0 %v871
        %v946 = vpop.f32.mrf.mxu0
        %v947 = vadd.f32 0.0, %v946
        %v948 = vpop.f32.mrf.mxu0
        %v949 = vadd.f32 0.0, %v948
        %950 = vdwg.mxu0
        %v951 = vadd.f32 %v865, %v947
        %v952 = vadd.f32 %v867, %v949
        %v953 = vld [vmem:[#allocation13] sm:$0x1]
        %v955 = vperm.slane %v953, 0
        %v957 = vmul.f32 %v951, %v955
        %v958 = vmul.f32 %v952, %v955
        %v959 = vld [vmem:[%s6] sm:$0x1]
        %v961 = vperm.slane %v959, 0
        %v963 = vadd.f32 %v957, %v961
        %v964 = vadd.f32 %v958, %v961
        %vm965 = vcmp.ge.f32.partialorder %v963, 0.0
        %vm966 = vcmp.ge.f32.partialorder %v964, 0.0
        %v967 = vstv %s518
        %v968 = vmul.f32 %v967, %v963
        %v969 = vmul.f32 %v967, %v964
        %v970 = vsel %vm965, %v963, %v968
        %v971 = vsel %vm966, %v964, %v969
        %v972 = vpack.c.bf16 %v971, %v970
        %v973 = vld [vmem:[#allocation15] sm:$0xff]
        %v974 = vld [vmem:[#allocation15 + $0x8] sm:$0xff]
        %v975 = vld [vmem:[#allocation15 + $0x10] sm:$0xff]
        %v976 = vld [vmem:[#allocation15 + $0x18] sm:$0xff]
        %v977 = vld [vmem:[#allocation15 + $0x20] sm:$0xff]
        %v978 = vld [vmem:[#allocation15 + $0x28] sm:$0xff]
        %v979 = vld [vmem:[#allocation15 + $0x30] sm:$0xff]
        %v980 = vld [vmem:[#allocation15 + $0x38] sm:$0xff]
        %v981 = vld [vmem:[#allocation15 + $0x40] sm:$0xff]
        %v982 = vld [vmem:[#allocation15 + $0x48] sm:$0xff]
        %v983 = vld [vmem:[#allocation15 + $0x50] sm:$0xff]
        %v984 = vld [vmem:[#allocation15 + $0x58] sm:$0xff]
        %v985 = vld [vmem:[#allocation15 + $0x60] sm:$0xff]
        %v986 = vld [vmem:[#allocation15 + $0x68] sm:$0xff]
        %v987 = vld [vmem:[#allocation15 + $0x70] sm:$0xff]
        %v988 = vld [vmem:[#allocation15 + $0x78] sm:$0xff]
        %v1005 = vunpack.c.l.b16 %v973
        %v1006 = vunpack.c.h.b16 %v973
        %v1007 = vunpack.c.l.b16 %v974
        %v1008 = vunpack.c.h.b16 %v974
        %v1009 = vunpack.c.l.b16 %v975
        %v1010 = vunpack.c.h.b16 %v975
        %v1011 = vunpack.c.l.b16 %v976
        %v1012 = vunpack.c.h.b16 %v976
        %v1013 = vunpack.c.l.b16 %v977
        %v1014 = vunpack.c.h.b16 %v977
        %v1015 = vunpack.c.l.b16 %v978
        %v1016 = vunpack.c.h.b16 %v978
        %v1017 = vunpack.c.l.b16 %v979
        %v1018 = vunpack.c.h.b16 %v979
        %v1019 = vunpack.c.l.b16 %v980
        %v1020 = vunpack.c.h.b16 %v980
        %v1021 = vunpack.c.l.b16 %v981
        %v1022 = vunpack.c.h.b16 %v981
        %v1023 = vunpack.c.l.b16 %v982
        %v1024 = vunpack.c.h.b16 %v982
        %v1025 = vunpack.c.l.b16 %v983
        %v1026 = vunpack.c.h.b16 %v983
        %v1027 = vunpack.c.l.b16 %v984
        %v1028 = vunpack.c.h.b16 %v984
        %v1029 = vunpack.c.l.b16 %v985
        %v1030 = vunpack.c.h.b16 %v985
        %v1031 = vunpack.c.l.b16 %v986
        %v1032 = vunpack.c.h.b16 %v986
        %v1033 = vunpack.c.l.b16 %v987
        %v1034 = vunpack.c.h.b16 %v987
        %v1035 = vunpack.c.l.b16 %v988
        %v1036 = vunpack.c.h.b16 %v988
        %v1037 = vpack.c.b16 %v1007, %v1005
        %v1038 = vpack.c.b16 %v1008, %v1006
        %v1039 = vpack.c.b16 %v1011, %v1009
        %v1040 = vpack.c.b16 %v1012, %v1010
        %v1041 = vpack.c.b16 %v1015, %v1013
        %v1042 = vpack.c.b16 %v1016, %v1014
        %v1043 = vpack.c.b16 %v1019, %v1017
        %v1044 = vpack.c.b16 %v1020, %v1018
        %v1045 = vpack.c.b16 %v1023, %v1021
        %v1046 = vpack.c.b16 %v1024, %v1022
        %v1047 = vpack.c.b16 %v1027, %v1025
        %v1048 = vpack.c.b16 %v1028, %v1026
        %v1049 = vpack.c.b16 %v1031, %v1029
        %v1050 = vpack.c.b16 %v1032, %v1030
        %v1051 = vpack.c.b16 %v1035, %v1033
        %v1052 = vpack.c.b16 %v1036, %v1034
        %1069 = vmatpush.bf16.msra.mxu0 %v1051
        %1070 = vmatpush.bf16.msra.mxu0 %v1049
        %1071 = vmatpush.bf16.msra.mxu0 %v1047
        %1072 = vmatpush.bf16.msra.mxu0 %v1045
        %1073 = vmatpush.bf16.msra.mxu0 %v1043
        %1074 = vmatpush.bf16.msra.mxu0 %v1041
        %1075 = vmatpush.bf16.msra.mxu0 %v1039
        %1076 = vmatpush.bf16.msra.mxu0 %v1037
        %1077 = vmatmul.bf16.gmra.mxu0 %v972
        %v1078 = vpop.f32.mrf.mxu0
        %v1079 = vadd.f32 0.0, %v1078
        %v1080 = vpop.f32.mrf.mxu0
        %v1081 = vadd.f32 0.0, %v1080
        %1082 = vdwg.mxu0
        %1083 = vmatpush.bf16.msra.mxu0 %v1052
        %1084 = vmatpush.bf16.msra.mxu0 %v1050
        %1085 = vmatpush.bf16.msra.mxu0 %v1048
        %1086 = vmatpush.bf16.msra.mxu0 %v1046
        %1087 = vmatpush.bf16.msra.mxu0 %v1044
        %1088 = vmatpush.bf16.msra.mxu0 %v1042
        %1089 = vmatpush.bf16.msra.mxu0 %v1040
        %1090 = vmatpush.bf16.msra.mxu0 %v1038
        %1091 = vmatmul.bf16.gmra.mxu0 %v972
        %v1092 = vpop.f32.mrf.mxu0
        %v1093 = vadd.f32 0.0, %v1092
        %v1094 = vpop.f32.mrf.mxu0
        %v1095 = vadd.f32 0.0, %v1094
        %1096 = vdwg.mxu0
        %v1097 = vld [vmem:[%s8] sm:$0x3]
        %v1099 = vperm.slane %v1097, 0
        %v1100 = vperm.slane %v1097, 1
        %v1103 = vmul.f32 %v1079, %v1099
        %v1104 = vmul.f32 %v1093, %v1100
        %v1105 = vmul.f32 %v1081, %v1099
        %v1106 = vmul.f32 %v1095, %v1100
        %v1107 = vld [vmem:[%s9] sm:$0x3]
        %v1109 = vperm.slane %v1107, 0
        %v1110 = vperm.slane %v1107, 1
        %v1113 = vadd.f32 %v1103, %v1109
        %v1114 = vadd.f32 %v1104, %v1110
        %v1115 = vadd.f32 %v1105, %v1109
        %v1116 = vadd.f32 %v1106, %v1110
        %v1117 = vadd.f32 %v520, %v1113
        %v1118 = vadd.f32 %v521, %v1114
        %v1119 = vadd.f32 %v522, %v1115
        %v1120 = vadd.f32 %v523, %v1116
        %vm1121 = vcmp.ge.f32.partialorder %v1117, 0.0
        %vm1122 = vcmp.ge.f32.partialorder %v1118, 0.0
        %vm1123 = vcmp.ge.f32.partialorder %v1119, 0.0
        %vm1124 = vcmp.ge.f32.partialorder %v1120, 0.0
        %v1125 = vstv %s519
        %v1126 = vmul.f32 %v1125, %v1117
        %v1127 = vmul.f32 %v1125, %v1118
        %v1128 = vmul.f32 %v1125, %v1119
        %v1129 = vmul.f32 %v1125, %v1120
        %v1130 = vsel %vm1121, %v1117, %v1126
        %v1131 = vsel %vm1122, %v1118, %v1127
        %v1132 = vsel %vm1123, %v1119, %v1128
        %v1133 = vsel %vm1124, %v1120, %v1129
        %1134 = vst [vmem:[%s514] sm:$0xff] %v1130
        %1135 = vst [vmem:[%s514 + $0x8] sm:$0xff] %v1131
        %1136 = vst [vmem:[%s514 + $0x10] sm:$0xff] %v1132
        %1137 = vst [vmem:[%s514 + $0x18] sm:$0xff] %v1133
        %s1138 = sand.u32 %s276, 1
        %s1139 = scalar_lea.sflag [#allocation5], %s1138
        %s1140 = sand.u32 %s276, 1
        %s1141 = smul.addr %s1140, 32
        %s1142 = scalar_lea.vmem [#allocation17], %s1141
        // Predicated region
        $region97: #{tpu_custom_call.1} parent=63 // pred_check
          %p1143 = pneg %p286
        $region98: #{tpu_custom_call.1} parent=63 // pred_check_branch
          %1145 = sbr.rel (%p1143) target = $region100
        $region99: #{tpu_custom_call.1} parent=63 // pred_region
          %s1146 = smul.u32 2, %s32
          %1148 = vsyncadd %s1139, 0
          %s1149 = smul.addr %s1146, 2
          %s1150 = smul.addr %s1149, 8
          %s1151 = scalar_lea.hbm %s11, %s1150
          %s1152 = sshll.u32 %s1142, 4
          %s1153 = int_to_ptr.vmem [resolvable:$true] %s1152
          %s1154 = sshll.u32 %s1151, 4
          %s1155 = int_to_ptr.hbm [resolvable:$true] %s1154
          %1160 = dma.vmem_to_hbm [thread:$0]  %s1153, 512, %s1155, %s1139, 256, 256, 16
        $region100: #{tpu_custom_call.1} parent=63 // pred_fallthru
          _
      $region64: #{tpu_custom_call.1} parent=5 // pred_fallthru
        _
      %p1161 = scmp.le.s32.totalorder 2, %s27
      // Predicated region
      $region101: #{tpu_custom_call.1} parent=5 // pred_check
        %p1162 = pneg %p1161
      $region102: #{tpu_custom_call.1} parent=5 // pred_check_branch
        %1164 = sbr.rel (%p1162) target = $region104
      $region103: #{tpu_custom_call.1} parent=5 // pred_region
        %s1165 = ssub.s32 %s27, 2
        // Predicated region
        $region105: #{tpu_custom_call.1} parent=103 // pred_check
          %p1166 = pneg %p292
        $region106: #{tpu_custom_call.1} parent=103 // pred_check_branch
          %1168 = sbr.rel (%p1166) target = $region108
        $region107: #{tpu_custom_call.1} parent=103 // pred_region
          %s1169 = sand.u32 %s277, 1
          %s1170 = scalar_lea.sflag [#allocation5], %s1169
          %s1171 = sand.u32 %s277, 1
          %s1172 = smul.addr %s1171, 32
          %s1173 = scalar_lea.vmem [#allocation17], %s1172
          %1175 = dma.done %s1170, 512
        $region108: #{tpu_custom_call.1} parent=103 // pred_fallthru
          _
      $region104: #{tpu_custom_call.1} parent=5 // pred_fallthru
        _
    $region6: #{tpu_custom_call.1} parent=1 // loop_footer
      %s31 = sadd.s32 1, %s27
    $region7: #{tpu_custom_call.1} parent=1 // loop_footer_branch
      %26 = sbr.rel target = $region3
    $region8: #{tpu_custom_call.1} parent=1 // loop_exit
      _
    %1176 = vsyncpa [#allocation4], 1
    %s1177 = scalar_lea.sflag [#allocation4], 1
    %1178 = vsyncpa %s1177, 1
    %1179 = vsyncpa [#allocation8], 1
    %1180 = vsyncpa [#allocation11], 1
    %1181 = vsyncpa [#allocation14], 1
    %1182 = vsyncpa [#allocation5], 1
    %s1183 = scalar_lea.sflag [#allocation5], 1
    %1184 = vsyncpa %s1183, 1
    %1185 = vsyncpa [#allocation6], 1
    %s1186 = scalar_lea.sflag [#allocation6], 1
    %1187 = vsyncpa %s1186, 1

</llo_original>
